<compile_context>
chip_gen: v7x
topology: tpu7x:2x2x1
jax: 0.10.0
libtpu: 0.0.40
codegen_flags: <defaults>
</compile_context>

<pallas_src>
import numpy as np
import jax
import jax.numpy as jnp
from jax.experimental import pallas as pl
from jax.experimental.pallas import tpu as pltpu

B = 2     # batch
S = 8     # seq_len
D = 128   # input_dim (lane-aligned)


def attention_pooling_kernel(x_ref, wq_ref, out_ref):
    # x_ref : (BB, S, D)  activations for this batch tile
    # wq_ref: (1, D)      nn.Linear(input_dim, 1).weight
    x = x_ref[...]                                        # (BB, S, D) f32
    wq = wq_ref[...]                                      # (1, D)

    # score[b, s] = <wq, x[b, s, :]>
    # (bias omitted: softmax over the sequence is shift-invariant)
    # VPU multiply + XLU cross-lane reduce; avoids MXU fill/drain latency.
    sc = jnp.sum(x * wq[None, :, :], axis=-1)             # (BB, S)

    # softmax over the sequence axis, f32 throughout
    m = jnp.max(sc, axis=-1, keepdims=True)               # (BB, 1)
    e = jnp.exp(sc - m)
    w = e / jnp.sum(e, axis=-1, keepdims=True)            # (BB, S) exact divide:
                                                          # tight parity w/ reference

    # pooled[b, :] = sum_s w[b, s] * x[b, s, :]  (sublane reduction)
    pooled = jnp.sum(w[:, :, None] * x, axis=1)           # (BB, D)
    out_ref[...] = pooled.astype(out_ref.dtype)


@jax.jit
def attention_pooling(x, wq, bq=None):
    """x: (B, S, D); wq: (1, D) (nn.Linear weight); bq: (1,) bias (unused:
    softmax over the sequence is invariant to a constant score shift). -> (B, D)."""
    del bq  # mathematically redundant, kept only for API parity with the module
    Bx, Sx, Dx = x.shape

    # Tile selection (static, shape-dependent):
    #  * small batches: one grid step -- the problem is launch/DMA latency bound.
    #  * large batches: 512-row tiles (multiple of 8 -> dense vst; ~2 MiB f32 tile
    #    at S=8/D=128 -> near HBM roofline; >=2 grid steps -> both v7x TCs run;
    #    2x double-buffered tile ~4 MiB -> fits v5e's 16 MiB scoped-VMEM default).
    if Bx <= 1024:
        BB = Bx
    else:
        BB = 512

    pad = (-Bx) % BB
    if pad:
        # Zero rows are safe: uniform softmax over zero scores, pooled result 0.
        x = jnp.pad(x, ((0, pad), (0, 0), (0, 0)))
    Bp = Bx + pad
    grid = (Bp // BB,)

    out = pl.pallas_call(
        attention_pooling_kernel,
        out_shape=jax.ShapeDtypeStruct((Bp, Dx), jnp.float32),
        grid=grid,
        in_specs=[
            pl.BlockSpec((BB, Sx, Dx), lambda i: (i, 0, 0)),
            pl.BlockSpec((1, Dx), lambda i: (0, 0)),
        ],
        out_specs=pl.BlockSpec((BB, Dx), lambda i: (i, 0)),
        compiler_params=pltpu.CompilerParams(
            dimension_semantics=("parallel",)),   # batch tiles independent (megacore)
    )(x, wq.reshape(1, Dx).astype(jnp.float32))

    return out[:Bx] if pad else out


# -------------------------- pure-JAX reference ------------------------------
def ref_attention_pooling(x, wq, bq):
    sc = jnp.einsum('bsd,od->bso', x, wq) + bq.reshape(1, 1, 1)   # (B, S, 1)
    w = jax.nn.softmax(sc, axis=1)
    return jnp.sum(w * x, axis=1)                                 # (B, D)


if __name__ == "__main__":
    key = jax.random.PRNGKey(0)
    kx, kw, kb = jax.random.split(key, 3)
    x = jax.random.normal(kx, (B, S, D), jnp.float32)
    wq = jax.random.normal(kw, (1, D), jnp.float32) * 0.05   # nn.Linear(input_dim, 1).weight
    bq = jax.random.normal(kb, (1,), jnp.float32) * 0.05     # nn.Linear(input_dim, 1).bias

    out = jax.block_until_ready(attention_pooling(x, wq, bq))
    ref = jax.block_until_ready(ref_attention_pooling(x, wq, bq))

    np.testing.assert_allclose(np.asarray(out), np.asarray(ref), rtol=1e-4, atol=1e-4)
    assert out.shape == (B, D)
    print("KERNEL_OK")
</pallas_src>

<mosaic_0001>
module attributes {stable_mosaic.version = 11 : i64} {
  func.func @attention_pooling_kernel(%arg0: i32, %arg1: memref<2x8x128xf32, #tpu.memory_space<vmem>>, %arg2: memref<1x128xf32, #tpu.memory_space<vmem>>, %arg3: memref<2x128xf32, #tpu.memory_space<vmem>>) attributes {dimension_semantics = [#tpu.dimension_semantics<parallel>], iteration_bounds = array<i64: 1>, scalar_prefetch = 0 : i64, scratch_operands = 0 : i64, tpu.core_type = #tpu.core_type<tc>, window_params = [{transform_indices = @transform_0, window_bounds = array<i64: 2, 8, 128>}, {pipeline_mode = #tpu.pipeline_mode<synchronous>, transform_indices = @transform_1, window_bounds = array<i64: 1, 128>}, {transform_indices = @transform_2, window_bounds = array<i64: 2, 128>}]} {
    %c0 = arith.constant 0 : index
    %c0_0 = arith.constant 0 : index
    %c0_1 = arith.constant 0 : index
    %0 = vector.load %arg1[%c0, %c0_0, %c0_1] : memref<2x8x128xf32, #tpu.memory_space<vmem>>, vector<2x8x128xf32>
    %c0_2 = arith.constant 0 : index
    %c0_3 = arith.constant 0 : index
    %1 = vector.load %arg2[%c0_2, %c0_3] : memref<1x128xf32, #tpu.memory_space<vmem>>, vector<1x128xf32>
    %2 = vector.shape_cast %1 : vector<1x128xf32> to vector<1x1x128xf32>
    %3 = vector.broadcast %2 : vector<1x1x128xf32> to vector<2x8x128xf32>
    %4 = arith.mulf %0, %3 : vector<2x8x128xf32>
    %cst = arith.constant dense<0.000000e+00> : vector<2x8xf32>
    %5 = vector.multi_reduction <add>, %4, %cst [2] : vector<2x8x128xf32> to vector<2x8xf32>
    %cst_4 = arith.constant dense<0xFF800000> : vector<2xf32>
    %6 = vector.multi_reduction <maximumf>, %5, %cst_4 [1] : vector<2x8xf32> to vector<2xf32>
    %7 = vector.shape_cast %6 : vector<2xf32> to vector<2x1xf32>
    %8 = vector.broadcast %7 : vector<2x1xf32> to vector<2x8xf32>
    %9 = arith.subf %5, %8 : vector<2x8xf32>
    %10 = math.exp %9 : vector<2x8xf32>
    %cst_5 = arith.constant dense<0.000000e+00> : vector<2xf32>
    %11 = vector.multi_reduction <add>, %10, %cst_5 [1] : vector<2x8xf32> to vector<2xf32>
    %12 = vector.shape_cast %11 : vector<2xf32> to vector<2x1xf32>
    %13 = vector.broadcast %12 : vector<2x1xf32> to vector<2x8xf32>
    %14 = arith.divf %10, %13 : vector<2x8xf32>
    %15 = vector.shape_cast %14 : vector<2x8xf32> to vector<2x8x1xf32>
    %16 = vector.broadcast %15 : vector<2x8x1xf32> to vector<2x8x128xf32>
    %17 = arith.mulf %16, %0 : vector<2x8x128xf32>
    %cst_6 = arith.constant dense<0.000000e+00> : vector<2x128xf32>
    %18 = vector.multi_reduction <add>, %17, %cst_6 [1] : vector<2x8x128xf32> to vector<2x128xf32>
    %c0_7 = arith.constant 0 : index
    %c0_8 = arith.constant 0 : index
    %19 = vector.load %arg3[%c0_7, %c0_8] : memref<2x128xf32, #tpu.memory_space<vmem>>, vector<2x128xf32>
    tpu.vector_store %arg3[%c0_7, %c0_8], %18 {strides = array<i32>} : memref<2x128xf32, #tpu.memory_space<vmem>>, vector<2x128xf32>,
    return
  }
  func.func @transform_0(%arg0: i32) -> (i32, i32, i32) {
    %c0_i32 = arith.constant 0 : i32
    %c0_i32_0 = arith.constant 0 : i32
    %c0_i32_1 = arith.constant 0 : i32
    return %arg0, %c0_i32, %c0_i32_0 : i32, i32, i32
  }
  func.func @transform_1(%arg0: i32) -> (i32, i32) {
    %c0_i32 = arith.constant 0 : i32
    %c0_i32_0 = arith.constant 0 : i32
    %c0_i32_1 = arith.constant 0 : i32
    return %c0_i32, %c0_i32_0 : i32, i32
  }
  func.func @transform_2(%arg0: i32) -> (i32, i32) {
    %c0_i32 = arith.constant 0 : i32
    %c0_i32_0 = arith.constant 0 : i32
    return %arg0, %c0_i32 : i32, i32
  }
}

</mosaic_0001>

<llo_original>
// kernel: attention_pooling.1
$region0: #{attention_pooling.1}
  #allocation0 [shape = 'u32[]', space=smem, size = 0x4, offset = 0x4, fixed_abs, tag = 'smem constant byte address 0x4 - core index']
  #allocation1 [shape = 'u32[144,128]{1,0:T(1,128)}', space=vmem, size = 0x12000, scoped, tag = 'internal scratch']
  %s0 = inlined_call_operand.hbm [shape: f32[2,8,128], index: 0, kind: input, shape index: {}]
  %s1 = inlined_call_operand.vmem [shape: f32[1,128], index: 1, kind: input, shape index: {}]
  %s2 = inlined_call_operand.hbm [shape: f32[2,128], index: 2, kind: output, shape index: {}]
  %s3 = sld [smem:[#allocation0]]
  $region22: #{attention_pooling.1} parent=0
    _
  %s5 = ssub.s32 1, %s3
  %s6 = scalar_select 0, %s5, %s3
  $region1: #{attention_pooling.1} parent=0
    #allocation2 [shape = 'u8[8192]{0}', space=vmem, size = 0x2000, scoped, tag = 'input window, operand 0, single buffered']
    #allocation3 [shape = 's32[1]{0}', space=sflag, size = 0x4, scoped, tag = 'scoped memory for attention_pooling.1']
    #allocation4 [shape = 's32[1]{0}', space=sflag, size = 0x4, scoped, tag = 'scoped memory for attention_pooling.1']
    #allocation5 [shape = 'u8[1024]{0}', space=vmem, size = 0x400, scoped, tag = 'output window, operand 0, single buffered']
    %7 = vsyncpa [#allocation3], 0
    %8 = vsyncpa [#allocation4], 0
    // Predicated region
    $region2: #{attention_pooling.1} parent=1 // pred_check
      _
    $region3: #{attention_pooling.1} parent=1 // pred_check_branch
      %10 = sbr.rel (0) target = $region5
    $region4: #{attention_pooling.1} parent=1 // pred_region
      %s12 = ssub.s32 256, 256
      %13 = vsyncadd [#allocation3], %s12
      %s14 = sshll.u32 [#allocation2], 4
      %s15 = int_to_ptr.vmem [resolvable:$true] %s14
      %20 = dma.hbm_to_vmem [thread:$0]  %s0, 256, %s15, [#allocation3], 128, 128, 8
    $region5: #{attention_pooling.1} parent=1 // pred_fallthru
      _
    // Predicated region
    $region6: #{attention_pooling.1} parent=1 // pred_check
      _
    $region7: #{attention_pooling.1} parent=1 // pred_check_branch
      %22 = sbr.rel (0) target = $region9
    $region8: #{attention_pooling.1} parent=1 // pred_region
      _
    $region9: #{attention_pooling.1} parent=1 // pred_fallthru
      _
    // Predicated region
    $region10: #{attention_pooling.1} parent=1 // pred_check
      _
    $region11: #{attention_pooling.1} parent=1 // pred_check_branch
      %24 = sbr.rel (0) target = $region13
    $region12: #{attention_pooling.1} parent=1 // pred_region
      %25 = dma.done [#allocation3], 256
    $region13: #{attention_pooling.1} parent=1 // pred_fallthru
      _
    %v26 = vld [vmem:[#allocation2] sm:$0xff]
    %v27 = vld [vmem:[#allocation2 + $0x8] sm:$0xff]
    %v28 = vld [vmem:[%s1] sm:$0x1]
    %v30 = vlaneseq
    %v31 = vshrl.u32 %v30, 7
    %v32 = vsub.s32 0, %v31
    %v33 = vrot.slane %v28, %v32
    %v35 = vmul.f32 %v26, %v33
    %v36 = vmul.f32 %v27, %v33
    %37 = vadd.xlane.f32.xlu0 %v35
    %v38 = vpop.xlane.xlu0 %37
    %39 = vadd.xlane.f32.xlu0 %v36
    %v40 = vpop.xlane.xlu0 %39
    %v43 = vlaneseq
    %v44 = vand.u32 %v43, 127
    %v45 = vlaneseq
    %v46 = vshrl.u32 %v45, 7
    %v47 = vsub.s32 %v44, %v46
    %v48 = vrot.slane %v38, %v47
    %v49 = vlaneseq
    %v50 = vshrl.u32 %v49, 7
    %v51 = vsub.s32 %v44, %v50
    %v52 = vrot.slane %v40, %v51
    %vm53 = vcmask 1041409
    %v54 = vsel %vm53, %v52, %v48
    %vm56 = vcmask 58368
    %v57 = vsel %vm56, %v54, -inf
    %58 = vmax.xlane.f32.xlu0 %v57
    %v59 = vpop.xlane.xlu0 %58
    %v61 = vlaneseq
    %v62 = vshrl.u32 %v61, 7
    %v63 = vsub.s32 0, %v62
    %v64 = vrot.slane %v59, %v63
    %v65 = vlaneseq
    %v66 = vshrl.u32 %v65, 7
    %v67 = vsub.s32 1, %v66
    %v68 = vrot.slane %v59, %v67
    %v71 = vsub.f32 %v38, %v64
    %v72 = vsub.f32 %v40, %v68
    %v73 = vmul.f32 %v71, 1.442695
    %v74 = vpow.pop %v73
    %v75 = vmul.f32 %v72, 1.442695
    %v76 = vpow.pop %v75
    %79 = vset.pattern.permute.xlu0 0
    %80 = vperm.xlu0 %79, %v74
    %v81 = vpop.permute.xlu0 %80
    %82 = vset.pattern.permute.xlu0 0
    %83 = vperm.xlu0 %82, %v76
    %v84 = vpop.permute.xlu0 %83
    %v85 = vlaneseq
    %v86 = vshrl.u32 %v85, 7
    %v87 = vsub.s32 %v44, %v86
    %v88 = vrot.slane %v81, %v87
    %v89 = vlaneseq
    %v90 = vshrl.u32 %v89, 7
    %v91 = vsub.s32 %v44, %v90
    %v92 = vrot.slane %v84, %v91
    %v93 = vsel %vm53, %v92, %v88
    %v95 = vsel %vm56, %v93, 0.0
    %96 = vadd.xlane.f32.xlu0 %v95
    %v97 = vpop.xlane.xlu0 %96
    %v99 = vlaneseq
    %v100 = vshrl.u32 %v99, 7
    %v101 = vsub.s32 0, %v100
    %v102 = vrot.slane %v97, %v101
    %v103 = vlaneseq
    %v104 = vshrl.u32 %v103, 7
    %v105 = vsub.s32 1, %v104
    %v106 = vrot.slane %v97, %v105
    %v109 = vrcp.pop %v102
    %v110 = vmul.f32 %v74, %v109
    %v111 = vrcp.pop %v106
    %v112 = vmul.f32 %v76, %v111
    %114 = vset.pattern.permute.xlu0 0
    %115 = vperm.xlu0 %114, %v110
    %v116 = vpop.permute.xlu0 %115
    %119 = vset.pattern.permute.xlu0 0
    %120 = vperm.xlu0 %119, %v112
    %v121 = vpop.permute.xlu0 %120
    %v123 = vmul.f32 %v116, %v26
    %v124 = vmul.f32 %v121, %v27
    %v125 = vrot.slane %v123, 4
    %v126 = vadd.f32 %v123, %v125
    %v127 = vrot.slane %v126, 2
    %v128 = vadd.f32 %v126, %v127
    %v129 = vrot.slane %v128, 1
    %v130 = vadd.f32 %v128, %v129
    %v131 = vrot.slane %v124, 4
    %v132 = vadd.f32 %v124, %v131
    %v133 = vrot.slane %v132, 2
    %v134 = vadd.f32 %v132, %v133
    %v135 = vrot.slane %v134, 1
    %v136 = vadd.f32 %v134, %v135
    %v139 = vsel %vm53, %v136, %v130
    %141 = vst [vmem:[#allocation5] sm:$0x3] %v139
    // Predicated region
    $region14: #{attention_pooling.1} parent=1 // pred_check
      _
    $region15: #{attention_pooling.1} parent=1 // pred_check_branch
      %143 = sbr.rel (0) target = $region17
    $region16: #{attention_pooling.1} parent=1 // pred_region
      %s145 = ssub.s32 32, 32
      %146 = vsyncadd [#allocation4], %s145
      %s148 = sshll.u32 [#allocation5], 4
      %s149 = int_to_ptr.vmem [resolvable:$true] %s148
      %151 = dma.vmem_to_hbm [thread:$0]  %s149, 32, %s2, [#allocation4]
    $region17: #{attention_pooling.1} parent=1 // pred_fallthru
      _
    // Predicated region
    $region18: #{attention_pooling.1} parent=1 // pred_check
      _
    $region19: #{attention_pooling.1} parent=1 // pred_check_branch
      %153 = sbr.rel (0) target = $region21
    $region20: #{attention_pooling.1} parent=1 // pred_region
      %154 = dma.done [#allocation4], 32
    $region21: #{attention_pooling.1} parent=1 // pred_fallthru
      _
    %155 = vsyncpa [#allocation3], 1
    %156 = vsyncpa [#allocation4], 1

</llo_original>
